<compile_context>
chip_gen: v5e
topology: v5e:2x2
jax: 0.10.0
libtpu: 0.0.40
codegen_flags: <defaults>
</compile_context>

<pallas_src>
import functools

import jax
import jax.numpy as jnp
from jax import lax
from jax.experimental import pallas as pl
from jax.experimental.pallas import tpu as pltpu


def _round_up(x, m):
    return (x + m - 1) // m * m


def rnn_lm_kernel(emb_ref,      # (T*Bp, Ep) bf16  time-major embeddings (const block)
                  w_ih_t_ref,   # (Ep, Hp)   bf16  W_ih^T, zero padded (const block)
                  w_hh_t_ref,   # (Hp, Hp)   f32   W_hh^T, zero padded (const block)
                  b_rnn_ref,    # (1, Hp)    f32   b_ih + b_hh (const block)
                  w_fc_t_ref,   # (Hp, tN)   bf16  W_fc^T tile j
                  b_fc_ref,     # (1, tN)    f32   b_fc tile j
                  out_ref,      # (Bp, tN)   f32   logits tile j
                  pre_ref,      # VMEM scratch (T*Bp, Hp) f32: hoisted projection
                  h_ref):       # VMEM scratch (Bp, Hp)   f32: last hidden state
    Bp = out_ref.shape[0]
    Hp = w_hh_t_ref.shape[0]
    T = pre_ref.shape[0] // Bp

    # Grid axis 0 tiles the FC over Vp; the recurrence runs once (step 0) and
    # its result persists in h_ref scratch across the remaining grid steps.
    @pl.when(pl.program_id(0) == 0)
    def _recurrence():
        # (1) Hoisted input projection: one bf16 MXU matmul for all timesteps,
        #     f32 accumulation + f32 bias add.
        pre_ref[...] = (
            jnp.dot(emb_ref[...], w_ih_t_ref[...],
                    preferred_element_type=jnp.float32)
            + b_rnn_ref[...])

        # (2) Serial recurrence: only h @ W_hh^T + tanh on the critical path.
        #     Hoist W_hh^T into vregs only when small; otherwise re-read from
        #     VMEM per step (avoids spills once Hp > ~128-256).
        if Hp <= 128:
            w_hh_t = w_hh_t_ref[...]

            def step(t, h):
                start = pl.multiple_of(t * Bp, Bp)
                px = pre_ref[pl.ds(start, Bp), :]
                return jnp.tanh(px + jnp.dot(
                    h, w_hh_t, preferred_element_type=jnp.float32))
        else:
            def step(t, h):
                start = pl.multiple_of(t * Bp, Bp)
                px = pre_ref[pl.ds(start, Bp), :]
                return jnp.tanh(px + jnp.dot(
                    h, w_hh_t_ref[...], preferred_element_type=jnp.float32))

        h0 = jnp.zeros((Bp, Hp), jnp.float32)
        h_ref[...] = lax.fori_loop(0, T, step, h0, unroll=min(T, 8))

    # (3) Final FC, one lane-dense Vp tile per grid step (bf16 MXU, f32 acc).
    h_last = h_ref[...].astype(w_fc_t_ref.dtype)
    out_ref[...] = (jnp.dot(h_last, w_fc_t_ref[...],
                            preferred_element_type=jnp.float32)
                    + b_fc_ref[...]).astype(out_ref.dtype)


def prepare_params(params):
    """One-time layout prep: transpose, zero-pad to lane/sublane-dense tiles,
    cast MXU operands to bf16.  Do NOT call this per forward pass."""
    emb_table = params["embedding"]             # (V, E)
    w_ih = params["w_ih"]                       # (H, E)
    w_hh = params["w_hh"]                       # (H, H)
    b_ih = params["b_ih"]                       # (H,)
    b_hh = params["b_hh"]                       # (H,)
    w_fc = params["w_fc"]                       # (V, H)
    b_fc = params["b_fc"]                       # (V,)

    V, E = emb_table.shape
    H = w_hh.shape[0]
    Ep = _round_up(E, 128)
    Hp = _round_up(H, 128)
    Vp = _round_up(V, 128)

    prepped = {
        # Padded embedding table (bf16) so the gather is already lane-dense.
        "emb_table": jnp.pad(emb_table,
                             ((0, 0), (0, Ep - E))).astype(jnp.bfloat16),
        # Zero padding keeps padded hidden columns exactly 0 in the recurrence.
        "w_ih_t": jnp.pad(w_ih.T,
                          ((0, Ep - E), (0, Hp - H))).astype(jnp.bfloat16),
        "w_hh_t": jnp.pad(w_hh.T,
                          ((0, Hp - H), (0, Hp - H))).astype(jnp.float32),
        "b_rnn": jnp.pad((b_ih + b_hh).reshape(1, H),
                         ((0, 0), (0, Hp - H))).astype(jnp.float32),
        "w_fc_t": jnp.pad(w_fc.T,
                          ((0, Hp - H), (0, Vp - V))).astype(jnp.bfloat16),
        "b_fc": jnp.pad(b_fc.reshape(1, V),
                        ((0, 0), (0, Vp - V))).astype(jnp.float32),
    }
    dims = {"V": V, "E": E, "H": H, "Ep": Ep, "Hp": Hp, "Vp": Vp}
    return prepped, dims


def rnn_language_model_forward(x_tokens, prepped, dims):
    """x_tokens: (B, T) int32.  Returns logits (B, V) float32."""
    B, T = x_tokens.shape
    V, Ep, Hp, Vp = dims["V"], dims["Ep"], dims["Hp"], dims["Vp"]
    Bp = _round_up(B, 8)

    # Embedding gather (XLA), time-major directly from the padded bf16 table.
    emb_tm = jnp.take(prepped["emb_table"], x_tokens.T, axis=0)   # (T, B, Ep)
    emb_tm = jnp.pad(emb_tm, ((0, 0), (0, Bp - B), (0, 0)))       # (T, Bp, Ep)
    emb_flat = emb_tm.reshape(T * Bp, Ep)                         # (T*Bp, Ep)

    # FC tile over Vp (lane-dense, multiple of 128).
    tile_n = next(t for t in (512, 256, 128) if Vp % t == 0)
    grid = (Vp // tile_n,)

    flops = (2 * T * Bp * Ep * Hp      # hoisted projection
             + 2 * T * Bp * Hp * Hp    # recurrence
             + 2 * Bp * Hp * Vp)       # final FC
    cost = pl.CostEstimate(
        flops=flops,
        transcendentals=T * Bp * Hp,
        bytes_accessed=(T * Bp * Ep * 2 + Ep * Hp * 2 + Hp * Hp * 4 + Hp * 4
                        + Hp * Vp * 2 + Vp * 4 + Bp * Vp * 4),
    )
    # Working set: resident blocks + double-buffered FC tiles + scratch.
    working_set = (T * Bp * Ep * 2 + Ep * Hp * 2 + Hp * Hp * 4 + Hp * 4
                   + 2 * (Hp * tile_n * 2 + tile_n * 4 + Bp * tile_n * 4)
                   + T * Bp * Hp * 4 + Bp * Hp * 4)
    vmem_limit = int(min(64 * 2**20, max(16 * 2**20, 2 * working_set)))

    logits_padded = pl.pallas_call(
        rnn_lm_kernel,
        out_shape=jax.ShapeDtypeStruct((Bp, Vp), jnp.float32),
        grid=grid,
        in_specs=[
            pl.BlockSpec((T * Bp, Ep), lambda j: (0, 0)),   # emb (const block)
            pl.BlockSpec((Ep, Hp), lambda j: (0, 0)),       # W_ih^T (const)
            pl.BlockSpec((Hp, Hp), lambda j: (0, 0)),       # W_hh^T (const)
            pl.BlockSpec((1, Hp), lambda j: (0, 0)),        # b_rnn (const)
            pl.BlockSpec((Hp, tile_n), lambda j: (0, j)),   # W_fc^T tile j
            pl.BlockSpec((1, tile_n), lambda j: (0, j)),    # b_fc tile j
        ],
        out_specs=pl.BlockSpec((Bp, tile_n), lambda j: (0, j)),
        scratch_shapes=[
            pltpu.VMEM((T * Bp, Hp), jnp.float32),  # hoisted projection
            pltpu.VMEM((Bp, Hp), jnp.float32),      # last hidden state
        ],
        compiler_params=pltpu.CompilerParams(
            # "arbitrary": grid step 0 computes h_last, later steps reuse it.
            dimension_semantics=("arbitrary",),
            vmem_limit_bytes=vmem_limit,
        ),
        cost_estimate=cost,
    )(emb_flat, prepped["w_ih_t"], prepped["w_hh_t"], prepped["b_rnn"],
      prepped["w_fc_t"], prepped["b_fc"])

    return logits_padded[:B, :V]


def reference_forward(x_tokens, params):
    """Pure-JAX f32 reference matching torch.nn.RNN (tanh) + Linear."""
    emb = jnp.take(params["embedding"], x_tokens, axis=0)     # (B, T, E)
    B, T, _ = emb.shape
    H = params["w_hh"].shape[0]
    h = jnp.zeros((B, H), jnp.float32)
    for t in range(T):
        h = jnp.tanh(emb[:, t, :] @ params["w_ih"].T + params["b_ih"]
                     + h @ params["w_hh"].T + params["b_hh"])
    return h @ params["w_fc"].T + params["b_fc"]


def init_params(key, vocab_size, embedding_dim, hidden_dim):
    ks = jax.random.split(key, 7)
    s_rnn = 1.0 / jnp.sqrt(hidden_dim)
    s_fc = 1.0 / jnp.sqrt(hidden_dim)
    return {
        "embedding": jax.random.normal(ks[0], (vocab_size, embedding_dim),
                                       jnp.float32),
        "w_ih": jax.random.uniform(ks[1], (hidden_dim, embedding_dim),
                                   jnp.float32, -s_rnn, s_rnn),
        "w_hh": jax.random.uniform(ks[2], (hidden_dim, hidden_dim),
                                   jnp.float32, -s_rnn, s_rnn),
        "b_ih": jax.random.uniform(ks[3], (hidden_dim,), jnp.float32,
                                   -s_rnn, s_rnn),
        "b_hh": jax.random.uniform(ks[4], (hidden_dim,), jnp.float32,
                                   -s_rnn, s_rnn),
        "w_fc": jax.random.uniform(ks[5], (vocab_size, hidden_dim),
                                   jnp.float32, -s_fc, s_fc),
        "b_fc": jax.random.uniform(ks[6], (vocab_size,), jnp.float32,
                                   -s_fc, s_fc),
    }


if __name__ == "__main__":
    VOCAB, EMB, HID, N_GRAM = 64, 32, 32, 8   # n_gram -> sequence length
    B, T = 2, N_GRAM

    key = jax.random.PRNGKey(0)
    k_par, k_tok = jax.random.split(key)
    params = init_params(k_par, VOCAB, EMB, HID)
    x = jax.random.randint(k_tok, (B, T), 0, VOCAB, dtype=jnp.int32)

    # One-time parameter prep (layout + bf16 cast), then the jitted forward.
    prepped, dims = prepare_params(params)
    prepped = jax.tree_util.tree_map(jax.block_until_ready, prepped)
    fwd = jax.jit(functools.partial(rnn_language_model_forward, dims=dims))

    logits = jax.block_until_ready(fwd(x, prepped))

    ref = reference_forward(x, params)
    assert logits.shape == (B, VOCAB)
    # Tolerance loosened vs. the all-f32 version: emb / W_ih / W_fc are bf16
    # MXU operands (f32 accumulation); the recurrence carry stays f32.
    max_err = float(jnp.max(jnp.abs(logits - ref)))
    assert jnp.allclose(logits, ref, atol=5e-2, rtol=5e-2), max_err

    print("KERNEL_OK")
</pallas_src>

<mosaic_0001>
module attributes {stable_mosaic.version = 11 : i64} {
  func.func @rnn_lm_kernel(%arg0: i32, %arg1: memref<64x128xbf16, #tpu.memory_space<vmem>>, %arg2: memref<128x128xbf16, #tpu.memory_space<vmem>>, %arg3: memref<128x128xf32, #tpu.memory_space<vmem>>, %arg4: memref<1x128xf32, #tpu.memory_space<vmem>>, %arg5: memref<128x128xbf16, #tpu.memory_space<vmem>>, %arg6: memref<1x128xf32, #tpu.memory_space<vmem>>, %arg7: memref<8x128xf32, #tpu.memory_space<vmem>>, %arg8: memref<64x128xf32, #tpu.memory_space<vmem>>, %arg9: memref<8x128xf32, #tpu.memory_space<vmem>>) attributes {dimension_semantics = [#tpu.dimension_semantics<arbitrary>], iteration_bounds = array<i64: 1>, scalar_prefetch = 0 : i64, scratch_operands = 2 : i64, tpu.core_type = #tpu.core_type<tc>, window_params = [{pipeline_mode = #tpu.pipeline_mode<synchronous>, transform_indices = @transform_0, window_bounds = array<i64: 64, 128>}, {pipeline_mode = #tpu.pipeline_mode<synchronous>, transform_indices = @transform_1, window_bounds = array<i64: 128, 128>}, {pipeline_mode = #tpu.pipeline_mode<synchronous>, transform_indices = @transform_2, window_bounds = array<i64: 128, 128>}, {pipeline_mode = #tpu.pipeline_mode<synchronous>, transform_indices = @transform_3, window_bounds = array<i64: 1, 128>}, {transform_indices = @transform_4, window_bounds = array<i64: 128, 128>}, {transform_indices = @transform_5, window_bounds = array<i64: 1, 128>}, {transform_indices = @transform_6, window_bounds = array<i64: 8, 128>}]} {
    %c0_i32 = arith.constant 0 : i32
    %0 = arith.cmpi eq, %arg0, %c0_i32 : i32
    %1 = arith.extui %0 : i1 to i32
    %c0_i32_0 = arith.constant 0 : i32
    %2 = arith.cmpi ne, %1, %c0_i32_0 : i32
    scf.if %2 {
      %c0_8 = arith.constant 0 : index
      %c0_9 = arith.constant 0 : index
      %11 = vector.load %arg1[%c0_8, %c0_9] : memref<64x128xbf16, #tpu.memory_space<vmem>>, vector<64x128xbf16>
      %c0_10 = arith.constant 0 : index
      %c0_11 = arith.constant 0 : index
      %12 = vector.load %arg2[%c0_10, %c0_11] : memref<128x128xbf16, #tpu.memory_space<vmem>>, vector<128x128xbf16>
      %cst_12 = arith.constant dense<0.000000e+00> : vector<64x128xf32>
      %13 = tpu.matmul %11, %12, %cst_12 {dimension_numbers = #tpu.dot_dimension_numbers<[1], [0], [0], [1], [0, 0, 1, 1], [], []>} : vector<64x128xbf16>, vector<128x128xbf16>, vector<64x128xf32> -> vector<64x128xf32>
      %c0_13 = arith.constant 0 : index
      %c0_14 = arith.constant 0 : index
      %14 = vector.load %arg4[%c0_13, %c0_14] : memref<1x128xf32, #tpu.memory_space<vmem>>, vector<1x128xf32>
      %15 = vector.broadcast %14 : vector<1x128xf32> to vector<64x128xf32>
      %16 = arith.addf %13, %15 : vector<64x128xf32>
      %c0_15 = arith.constant 0 : index
      %c0_16 = arith.constant 0 : index
      %17 = vector.load %arg8[%c0_15, %c0_16] : memref<64x128xf32, #tpu.memory_space<vmem>>, vector<64x128xf32>
      tpu.vector_store %arg8[%c0_15, %c0_16], %16 {strides = array<i32>} : memref<64x128xf32, #tpu.memory_space<vmem>>, vector<64x128xf32>,
      %c0_17 = arith.constant 0 : index
      %c0_18 = arith.constant 0 : index
      %18 = vector.load %arg3[%c0_17, %c0_18] : memref<128x128xf32, #tpu.memory_space<vmem>>, vector<128x128xf32>
      %cst_19 = arith.constant 0.000000e+00 : f32
      %19 = vector.broadcast %cst_19 : f32 to vector<8x128xf32>
      %c0_i32_20 = arith.constant 0 : i32
      %c8_i32 = arith.constant 8 : i32
      %20 = arith.muli %c0_i32_20, %c8_i32 : i32
      %21 = tpu.assume_multiple %20, 8 : i32
      %22 = arith.index_cast %21 : i32 to index
      %c0_21 = arith.constant 0 : index
      %23 = vector.load %arg8[%22, %c0_21] : memref<64x128xf32, #tpu.memory_space<vmem>>, vector<8x128xf32>
      %cst_22 = arith.constant dense<0.000000e+00> : vector<8x128xf32>
      %24 = tpu.matmul %19, %18, %cst_22 {dimension_numbers = #tpu.dot_dimension_numbers<[1], [0], [0], [1], [0, 0, 1, 1], [], []>} : vector<8x128xf32>, vector<128x128xf32>, vector<8x128xf32> -> vector<8x128xf32>
      %25 = arith.addf %23, %24 : vector<8x128xf32>
      %26 = math.tanh %25 : vector<8x128xf32>
      %c1_i32 = arith.constant 1 : i32
      %c8_i32_23 = arith.constant 8 : i32
      %27 = arith.muli %c1_i32, %c8_i32_23 : i32
      %28 = tpu.assume_multiple %27, 8 : i32
      %29 = arith.index_cast %28 : i32 to index
      %c0_24 = arith.constant 0 : index
      %30 = vector.load %arg8[%29, %c0_24] : memref<64x128xf32, #tpu.memory_space<vmem>>, vector<8x128xf32>
      %cst_25 = arith.constant dense<0.000000e+00> : vector<8x128xf32>
      %31 = tpu.matmul %26, %18, %cst_25 {dimension_numbers = #tpu.dot_dimension_numbers<[1], [0], [0], [1], [0, 0, 1, 1], [], []>} : vector<8x128xf32>, vector<128x128xf32>, vector<8x128xf32> -> vector<8x128xf32>
      %32 = arith.addf %30, %31 : vector<8x128xf32>
      %33 = math.tanh %32 : vector<8x128xf32>
      %c2_i32 = arith.constant 2 : i32
      %c8_i32_26 = arith.constant 8 : i32
      %34 = arith.muli %c2_i32, %c8_i32_26 : i32
      %35 = tpu.assume_multiple %34, 8 : i32
      %36 = arith.index_cast %35 : i32 to index
      %c0_27 = arith.constant 0 : index
      %37 = vector.load %arg8[%36, %c0_27] : memref<64x128xf32, #tpu.memory_space<vmem>>, vector<8x128xf32>
      %cst_28 = arith.constant dense<0.000000e+00> : vector<8x128xf32>
      %38 = tpu.matmul %33, %18, %cst_28 {dimension_numbers = #tpu.dot_dimension_numbers<[1], [0], [0], [1], [0, 0, 1, 1], [], []>} : vector<8x128xf32>, vector<128x128xf32>, vector<8x128xf32> -> vector<8x128xf32>
      %39 = arith.addf %37, %38 : vector<8x128xf32>
      %40 = math.tanh %39 : vector<8x128xf32>
      %c3_i32 = arith.constant 3 : i32
      %c8_i32_29 = arith.constant 8 : i32
      %41 = arith.muli %c3_i32, %c8_i32_29 : i32
      %42 = tpu.assume_multiple %41, 8 : i32
      %43 = arith.index_cast %42 : i32 to index
      %c0_30 = arith.constant 0 : index
      %44 = vector.load %arg8[%43, %c0_30] : memref<64x128xf32, #tpu.memory_space<vmem>>, vector<8x128xf32>
      %cst_31 = arith.constant dense<0.000000e+00> : vector<8x128xf32>
      %45 = tpu.matmul %40, %18, %cst_31 {dimension_numbers = #tpu.dot_dimension_numbers<[1], [0], [0], [1], [0, 0, 1, 1], [], []>} : vector<8x128xf32>, vector<128x128xf32>, vector<8x128xf32> -> vector<8x128xf32>
      %46 = arith.addf %44, %45 : vector<8x128xf32>
      %47 = math.tanh %46 : vector<8x128xf32>
      %c4_i32 = arith.constant 4 : i32
      %c8_i32_32 = arith.constant 8 : i32
      %48 = arith.muli %c4_i32, %c8_i32_32 : i32
      %49 = tpu.assume_multiple %48, 8 : i32
      %50 = arith.index_cast %49 : i32 to index
      %c0_33 = arith.constant 0 : index
      %51 = vector.load %arg8[%50, %c0_33] : memref<64x128xf32, #tpu.memory_space<vmem>>, vector<8x128xf32>
      %cst_34 = arith.constant dense<0.000000e+00> : vector<8x128xf32>
      %52 = tpu.matmul %47, %18, %cst_34 {dimension_numbers = #tpu.dot_dimension_numbers<[1], [0], [0], [1], [0, 0, 1, 1], [], []>} : vector<8x128xf32>, vector<128x128xf32>, vector<8x128xf32> -> vector<8x128xf32>
      %53 = arith.addf %51, %52 : vector<8x128xf32>
      %54 = math.tanh %53 : vector<8x128xf32>
      %c5_i32 = arith.constant 5 : i32
      %c8_i32_35 = arith.constant 8 : i32
      %55 = arith.muli %c5_i32, %c8_i32_35 : i32
      %56 = tpu.assume_multiple %55, 8 : i32
      %57 = arith.index_cast %56 : i32 to index
      %c0_36 = arith.constant 0 : index
      %58 = vector.load %arg8[%57, %c0_36] : memref<64x128xf32, #tpu.memory_space<vmem>>, vector<8x128xf32>
      %cst_37 = arith.constant dense<0.000000e+00> : vector<8x128xf32>
      %59 = tpu.matmul %54, %18, %cst_37 {dimension_numbers = #tpu.dot_dimension_numbers<[1], [0], [0], [1], [0, 0, 1, 1], [], []>} : vector<8x128xf32>, vector<128x128xf32>, vector<8x128xf32> -> vector<8x128xf32>
      %60 = arith.addf %58, %59 : vector<8x128xf32>
      %61 = math.tanh %60 : vector<8x128xf32>
      %c6_i32 = arith.constant 6 : i32
      %c8_i32_38 = arith.constant 8 : i32
      %62 = arith.muli %c6_i32, %c8_i32_38 : i32
      %63 = tpu.assume_multiple %62, 8 : i32
      %64 = arith.index_cast %63 : i32 to index
      %c0_39 = arith.constant 0 : index
      %65 = vector.load %arg8[%64, %c0_39] : memref<64x128xf32, #tpu.memory_space<vmem>>, vector<8x128xf32>
      %cst_40 = arith.constant dense<0.000000e+00> : vector<8x128xf32>
      %66 = tpu.matmul %61, %18, %cst_40 {dimension_numbers = #tpu.dot_dimension_numbers<[1], [0], [0], [1], [0, 0, 1, 1], [], []>} : vector<8x128xf32>, vector<128x128xf32>, vector<8x128xf32> -> vector<8x128xf32>
      %67 = arith.addf %65, %66 : vector<8x128xf32>
      %68 = math.tanh %67 : vector<8x128xf32>
      %c7_i32 = arith.constant 7 : i32
      %c8_i32_41 = arith.constant 8 : i32
      %69 = arith.muli %c7_i32, %c8_i32_41 : i32
      %70 = tpu.assume_multiple %69, 8 : i32
      %71 = arith.index_cast %70 : i32 to index
      %c0_42 = arith.constant 0 : index
      %72 = vector.load %arg8[%71, %c0_42] : memref<64x128xf32, #tpu.memory_space<vmem>>, vector<8x128xf32>
      %cst_43 = arith.constant dense<0.000000e+00> : vector<8x128xf32>
      %73 = tpu.matmul %68, %18, %cst_43 {dimension_numbers = #tpu.dot_dimension_numbers<[1], [0], [0], [1], [0, 0, 1, 1], [], []>} : vector<8x128xf32>, vector<128x128xf32>, vector<8x128xf32> -> vector<8x128xf32>
      %74 = arith.addf %72, %73 : vector<8x128xf32>
      %75 = math.tanh %74 : vector<8x128xf32>
      %c8_i32_44 = arith.constant 8 : i32
      %c0_45 = arith.constant 0 : index
      %c0_46 = arith.constant 0 : index
      %76 = vector.load %arg9[%c0_45, %c0_46] : memref<8x128xf32, #tpu.memory_space<vmem>>, vector<8x128xf32>
      tpu.vector_store %arg9[%c0_45, %c0_46], %75 {strides = array<i32>} : memref<8x128xf32, #tpu.memory_space<vmem>>, vector<8x128xf32>,
    } else {
    }
    %c0 = arith.constant 0 : index
    %c0_1 = arith.constant 0 : index
    %3 = vector.load %arg9[%c0, %c0_1] : memref<8x128xf32, #tpu.memory_space<vmem>>, vector<8x128xf32>
    %4 = arith.truncf %3 : vector<8x128xf32> to vector<8x128xbf16>
    %c0_2 = arith.constant 0 : index
    %c0_3 = arith.constant 0 : index
    %5 = vector.load %arg5[%c0_2, %c0_3] : memref<128x128xbf16, #tpu.memory_space<vmem>>, vector<128x128xbf16>
    %cst = arith.constant dense<0.000000e+00> : vector<8x128xf32>
    %6 = tpu.matmul %4, %5, %cst {dimension_numbers = #tpu.dot_dimension_numbers<[1], [0], [0], [1], [0, 0, 1, 1], [], []>} : vector<8x128xbf16>, vector<128x128xbf16>, vector<8x128xf32> -> vector<8x128xf32>
    %c0_4 = arith.constant 0 : index
    %c0_5 = arith.constant 0 : index
    %7 = vector.load %arg6[%c0_4, %c0_5] : memref<1x128xf32, #tpu.memory_space<vmem>>, vector<1x128xf32>
    %8 = vector.broadcast %7 : vector<1x128xf32> to vector<8x128xf32>
    %9 = arith.addf %6, %8 : vector<8x128xf32>
    %c0_6 = arith.constant 0 : index
    %c0_7 = arith.constant 0 : index
    %10 = vector.load %arg7[%c0_6, %c0_7] : memref<8x128xf32, #tpu.memory_space<vmem>>, vector<8x128xf32>
    tpu.vector_store %arg7[%c0_6, %c0_7], %9 {strides = array<i32>} : memref<8x128xf32, #tpu.memory_space<vmem>>, vector<8x128xf32>,
    return
  }
  func.func @transform_0(%arg0: i32) -> (i32, i32) {
    %c0_i32 = arith.constant 0 : i32
    %c0_i32_0 = arith.constant 0 : i32
    %c0_i32_1 = arith.constant 0 : i32
    return %c0_i32, %c0_i32_0 : i32, i32
  }
  func.func @transform_1(%arg0: i32) -> (i32, i32) {
    %c0_i32 = arith.constant 0 : i32
    %c0_i32_0 = arith.constant 0 : i32
    %c0_i32_1 = arith.constant 0 : i32
    return %c0_i32, %c0_i32_0 : i32, i32
  }
  func.func @transform_2(%arg0: i32) -> (i32, i32) {
    %c0_i32 = arith.constant 0 : i32
    %c0_i32_0 = arith.constant 0 : i32
    %c0_i32_1 = arith.constant 0 : i32
    return %c0_i32, %c0_i32_0 : i32, i32
  }
  func.func @transform_3(%arg0: i32) -> (i32, i32) {
    %c0_i32 = arith.constant 0 : i32
    %c0_i32_0 = arith.constant 0 : i32
    %c0_i32_1 = arith.constant 0 : i32
    return %c0_i32, %c0_i32_0 : i32, i32
  }
  func.func @transform_4(%arg0: i32) -> (i32, i32) {
    %c0_i32 = arith.constant 0 : i32
    %c0_i32_0 = arith.constant 0 : i32
    return %c0_i32, %arg0 : i32, i32
  }
  func.func @transform_5(%arg0: i32) -> (i32, i32) {
    %c0_i32 = arith.constant 0 : i32
    %c0_i32_0 = arith.constant 0 : i32
    return %c0_i32, %arg0 : i32, i32
  }
  func.func @transform_6(%arg0: i32) -> (i32, i32) {
    %c0_i32 = arith.constant 0 : i32
    %c0_i32_0 = arith.constant 0 : i32
    return %c0_i32, %arg0 : i32, i32
  }
}

</mosaic_0001>

<llo_original>
// kernel: rnn_language_model_forward.1
$region0: #{rnn_language_model_forward.1}
  #allocation0 [shape = 'u32[]', space=smem, size = 0x4, offset = 0x4, fixed_abs, tag = 'smem constant byte address 0x4 - core index']
  #allocation1 [shape = 'u32[72,128]{1,0:T(1,128)}', space=vmem, size = 0x9000, scoped, tag = 'internal scratch']
  #allocation2 [shape = 'f32[64,128]{1,0:T(8,128)}', space=vmem, size = 0x8000, scoped, tag = 'scratch operand']
  #allocation3 [shape = 'f32[8,128]{1,0:T(8,128)}', space=vmem, size = 0x1000, scoped, tag = 'scratch operand']
  %s0 = inlined_call_operand.vmem [shape: bf16[64,128], index: 0, kind: input, shape index: {}]
  %s1 = inlined_call_operand.hbm [shape: bf16[128,128], index: 1, kind: input, shape index: {}]
  %s2 = inlined_call_operand.vmem [shape: f32[128,128], index: 2, kind: input, shape index: {}]
  %s3 = inlined_call_operand.vmem [shape: f32[1,128], index: 3, kind: input, shape index: {}]
  %s4 = inlined_call_operand.hbm [shape: bf16[128,128], index: 4, kind: input, shape index: {}]
  %s5 = inlined_call_operand.vmem [shape: f32[1,128], index: 5, kind: input, shape index: {}]
  %s6 = inlined_call_operand.vmem [shape: f32[8,128], index: 6, kind: output, shape index: {}]
  %s7 = sld [smem:[#allocation0]]
  $region46: #{rnn_language_model_forward.1} parent=0
    _
  %s9 = ssub.s32 1, %s7
  %s10 = scalar_select 0, %s9, %s7
  $region1: #{rnn_language_model_forward.1} parent=0
    #allocation4 [shape = 'u8[32768]{0}', space=vmem, size = 0x8000, scoped, tag = 'input window, operand 1, single buffered']
    #allocation5 [shape = 's32[1]{0}', space=sflag, size = 0x4, scoped, tag = 'scoped memory for rnn_language_model_forward.1']
    #allocation6 [shape = 'u8[32768]{0}', space=vmem, size = 0x8000, scoped, tag = 'input window, operand 4, single buffered']
    #allocation7 [shape = 's32[1]{0}', space=sflag, size = 0x4, scoped, tag = 'scoped memory for rnn_language_model_forward.1']
    %11 = vsyncpa [#allocation5], 0
    %12 = vsyncpa [#allocation7], 0
    // Predicated region
    $region2: #{rnn_language_model_forward.1} parent=1 // pred_check
      _
    $region3: #{rnn_language_model_forward.1} parent=1 // pred_check_branch
      %14 = sbr.rel (0) target = $region5
    $region4: #{rnn_language_model_forward.1} parent=1 // pred_region
      _
    $region5: #{rnn_language_model_forward.1} parent=1 // pred_fallthru
      _
    // Predicated region
    $region6: #{rnn_language_model_forward.1} parent=1 // pred_check
      _
    $region7: #{rnn_language_model_forward.1} parent=1 // pred_check_branch
      %16 = sbr.rel (0) target = $region9
    $region8: #{rnn_language_model_forward.1} parent=1 // pred_region
      %18 = vsyncadd [#allocation5], 0
      %s19 = sshll.u32 %s1, 4
      %s20 = int_to_ptr.hbm [resolvable:$true] %s19
      %s21 = sshll.u32 [#allocation4], 4
      %s22 = int_to_ptr.vmem [resolvable:$true] %s21
      %27 = dma.hbm_to_vmem [thread:$0]  %s20, 1024, %s22, [#allocation5], 64, 64, 4
    $region9: #{rnn_language_model_forward.1} parent=1 // pred_fallthru
      _
    // Predicated region
    $region10: #{rnn_language_model_forward.1} parent=1 // pred_check
      _
    $region11: #{rnn_language_model_forward.1} parent=1 // pred_check_branch
      %29 = sbr.rel (0) target = $region13
    $region12: #{rnn_language_model_forward.1} parent=1 // pred_region
      _
    $region13: #{rnn_language_model_forward.1} parent=1 // pred_fallthru
      _
    // Predicated region
    $region14: #{rnn_language_model_forward.1} parent=1 // pred_check
      _
    $region15: #{rnn_language_model_forward.1} parent=1 // pred_check_branch
      %31 = sbr.rel (0) target = $region17
    $region16: #{rnn_language_model_forward.1} parent=1 // pred_region
      _
    $region17: #{rnn_language_model_forward.1} parent=1 // pred_fallthru
      _
    // Predicated region
    $region18: #{rnn_language_model_forward.1} parent=1 // pred_check
      _
    $region19: #{rnn_language_model_forward.1} parent=1 // pred_check_branch
      %33 = sbr.rel (0) target = $region21
    $region20: #{rnn_language_model_forward.1} parent=1 // pred_region
      %35 = vsyncadd [#allocation7], 0
      %s36 = sshll.u32 %s4, 4
      %s37 = int_to_ptr.hbm [resolvable:$true] %s36
      %s38 = sshll.u32 [#allocation6], 4
      %s39 = int_to_ptr.vmem [resolvable:$true] %s38
      %44 = dma.hbm_to_vmem [thread:$0]  %s37, 1024, %s39, [#allocation7], 64, 64, 4
    $region21: #{rnn_language_model_forward.1} parent=1 // pred_fallthru
      _
    // Predicated region
    $region22: #{rnn_language_model_forward.1} parent=1 // pred_check
      _
    $region23: #{rnn_language_model_forward.1} parent=1 // pred_check_branch
      %46 = sbr.rel (0) target = $region25
    $region24: #{rnn_language_model_forward.1} parent=1 // pred_region
      _
    $region25: #{rnn_language_model_forward.1} parent=1 // pred_fallthru
      _
    // Predicated region
    $region26: #{rnn_language_model_forward.1} parent=1 // pred_check
      _
    $region27: #{rnn_language_model_forward.1} parent=1 // pred_check_branch
      %48 = sbr.rel (0) target = $region29
    $region28: #{rnn_language_model_forward.1} parent=1 // pred_region
      %50 = dma.done [#allocation5], 1024
    $region29: #{rnn_language_model_forward.1} parent=1 // pred_fallthru
      _
    // Predicated region
    $region30: #{rnn_language_model_forward.1} parent=1 // pred_check
      _
    $region31: #{rnn_language_model_forward.1} parent=1 // pred_check_branch
      %52 = sbr.rel (0) target = $region33
    $region32: #{rnn_language_model_forward.1} parent=1 // pred_region
      %54 = dma.done [#allocation7], 1024
    $region33: #{rnn_language_model_forward.1} parent=1 // pred_fallthru
      _
    %p55 = scmp.eq.s32.totalorder 0, 0
    // Predicated region
    $region34: #{rnn_language_model_forward.1} parent=1 // pred_check
      %p56 = pneg %p55
    $region35: #{rnn_language_model_forward.1} parent=1 // pred_check_branch
      %58 = sbr.rel (%p56) target = $region37
    $region36: #{rnn_language_model_forward.1} parent=1 // pred_region
      %v59 = vld [vmem:[%s0] sm:$0xf]
      %v60 = vld [vmem:[%s0 + $0x4] sm:$0xf]
      %v61 = vld [vmem:[%s0 + $0x8] sm:$0xf]
      %v62 = vld [vmem:[%s0 + $0xc] sm:$0xf]
      %v63 = vld [vmem:[%s0 + $0x10] sm:$0xf]
      %v64 = vld [vmem:[%s0 + $0x14] sm:$0xf]
      %v65 = vld [vmem:[%s0 + $0x18] sm:$0xf]
      %v66 = vld [vmem:[%s0 + $0x1c] sm:$0xf]
      %v67 = vld [vmem:[#allocation4] sm:$0xf]
      %v68 = vld [vmem:[#allocation4 + $0x4] sm:$0xf]
      %v69 = vld [vmem:[#allocation4 + $0x8] sm:$0xf]
      %v70 = vld [vmem:[#allocation4 + $0xc] sm:$0xf]
      %v71 = vld [vmem:[#allocation4 + $0x10] sm:$0xf]
      %v72 = vld [vmem:[#allocation4 + $0x14] sm:$0xf]
      %v73 = vld [vmem:[#allocation4 + $0x18] sm:$0xf]
      %v74 = vld [vmem:[#allocation4 + $0x1c] sm:$0xf]
      %v75 = vld [vmem:[#allocation4 + $0x20] sm:$0xf]
      %v76 = vld [vmem:[#allocation4 + $0x24] sm:$0xf]
      %v77 = vld [vmem:[#allocation4 + $0x28] sm:$0xf]
      %v78 = vld [vmem:[#allocation4 + $0x2c] sm:$0xf]
      %v79 = vld [vmem:[#allocation4 + $0x30] sm:$0xf]
      %v80 = vld [vmem:[#allocation4 + $0x34] sm:$0xf]
      %v81 = vld [vmem:[#allocation4 + $0x38] sm:$0xf]
      %v82 = vld [vmem:[#allocation4 + $0x3c] sm:$0xf]
      %v83 = vld [vmem:[%s3] sm:$0x1]
      %v85 = vperm.slane %v83, 0
      %v95 = vunpack.c.l.b16 %v59
      %v96 = vunpack.c.l.b16 %v60
      %v97 = vunpack.c.l.b16 %v61
      %v98 = vunpack.c.l.b16 %v62
      %v99 = vunpack.c.l.b16 %v63
      %v100 = vunpack.c.l.b16 %v64
      %v101 = vunpack.c.l.b16 %v65
      %v102 = vunpack.c.l.b16 %v66
      %v103 = vpack.c.b16 %v96, %v95
      %v104 = vpack.c.b16 %v98, %v97
      %v105 = vpack.c.b16 %v100, %v99
      %v106 = vpack.c.b16 %v102, %v101
      %v127 = vunpack.c.l.b16 %v67
      %v128 = vunpack.c.l.b16 %v68
      %v129 = vunpack.c.l.b16 %v69
      %v130 = vunpack.c.l.b16 %v70
      %v131 = vunpack.c.l.b16 %v71
      %v132 = vunpack.c.l.b16 %v72
      %v133 = vunpack.c.l.b16 %v73
      %v134 = vunpack.c.l.b16 %v74
      %v135 = vunpack.c.l.b16 %v75
      %v136 = vunpack.c.l.b16 %v76
      %v137 = vunpack.c.l.b16 %v77
      %v138 = vunpack.c.l.b16 %v78
      %v139 = vunpack.c.l.b16 %v79
      %v140 = vunpack.c.l.b16 %v80
      %v141 = vunpack.c.l.b16 %v81
      %v142 = vunpack.c.l.b16 %v82
      %v143 = vpack.c.b16 %v128, %v127
      %v144 = vpack.c.b16 %v130, %v129
      %v145 = vpack.c.b16 %v132, %v131
      %v146 = vpack.c.b16 %v134, %v133
      %v147 = vpack.c.b16 %v136, %v135
      %v148 = vpack.c.b16 %v138, %v137
      %v149 = vpack.c.b16 %v140, %v139
      %v150 = vpack.c.b16 %v142, %v141
      %159 = vmatpush.bf16.msra.mxu0 %v150
      %160 = vmatpush.bf16.msra.mxu0 %v149
      %161 = vmatpush.bf16.msra.mxu0 %v148
      %162 = vmatpush.bf16.msra.mxu0 %v147
      %163 = vmatpush.bf16.msra.mxu0 %v146
      %164 = vmatpush.bf16.msra.mxu0 %v145
      %165 = vmatpush.bf16.msra.mxu0 %v144
      %166 = vmatpush.bf16.msra.mxu0 %v143
      %167 = vmatmul.bf16.gmra.mxu0 %v103
      %v168 = vpop.f32.mrf.mxu0
      %v169 = vadd.f32 %v85, %v168
      %v170 = vpop.f32.mrf.mxu0
      %v171 = vadd.f32 %v85, %v170
      %172 = vmatmul.bf16.gmra.mxu0 %v104
      %v173 = vpop.f32.mrf.mxu0
      %v174 = vadd.f32 %v85, %v173
      %v175 = vpop.f32.mrf.mxu0
      %v176 = vadd.f32 %v85, %v175
      %177 = vmatmul.bf16.gmra.mxu0 %v105
      %v178 = vpop.f32.mrf.mxu0
      %v179 = vadd.f32 %v85, %v178
      %v180 = vpop.f32.mrf.mxu0
      %v181 = vadd.f32 %v85, %v180
      %182 = vmatmul.bf16.gmra.mxu0 %v106
      %v183 = vpop.f32.mrf.mxu0
      %v184 = vadd.f32 %v85, %v183
      %v185 = vpop.f32.mrf.mxu0
      %v186 = vadd.f32 %v85, %v185
      %187 = vdwg.mxu0
      %188 = vst [vmem:[#allocation2] sm:$0xff] %v169
      %189 = vst [vmem:[#allocation2 + $0x8] sm:$0xff] %v171
      %190 = vst [vmem:[#allocation2 + $0x10] sm:$0xff] %v174
      %191 = vst [vmem:[#allocation2 + $0x18] sm:$0xff] %v176
      %192 = vst [vmem:[#allocation2 + $0x20] sm:$0xff] %v179
      %193 = vst [vmem:[#allocation2 + $0x28] sm:$0xff] %v181
      %194 = vst [vmem:[#allocation2 + $0x30] sm:$0xff] %v184
      %195 = vst [vmem:[#allocation2 + $0x38] sm:$0xff] %v186
      %v196 = vld [vmem:[%s2] sm:$0xff]
      %v197 = vld [vmem:[%s2 + $0x8] sm:$0xff]
      %v198 = vld [vmem:[%s2 + $0x10] sm:$0xff]
      %v199 = vld [vmem:[%s2 + $0x18] sm:$0xff]
      %v200 = vld [vmem:[%s2 + $0x20] sm:$0xff]
      %v201 = vld [vmem:[%s2 + $0x28] sm:$0xff]
      %v202 = vld [vmem:[%s2 + $0x30] sm:$0xff]
      %v203 = vld [vmem:[%s2 + $0x38] sm:$0xff]
      %v204 = vld [vmem:[%s2 + $0x40] sm:$0xff]
      %v205 = vld [vmem:[%s2 + $0x48] sm:$0xff]
      %v206 = vld [vmem:[%s2 + $0x50] sm:$0xff]
      %v207 = vld [vmem:[%s2 + $0x58] sm:$0xff]
      %v208 = vld [vmem:[%s2 + $0x60] sm:$0xff]
      %v209 = vld [vmem:[%s2 + $0x68] sm:$0xff]
      %v210 = vld [vmem:[%s2 + $0x70] sm:$0xff]
      %v211 = vld [vmem:[%s2 + $0x78] sm:$0xff]
      %v212 = vld [vmem:[#allocation2] sm:$0xff]
      %213 = vmatpush.msra.mxu0 %v211
      %214 = vmatpush.msra.mxu0 %v210
      %215 = vmatpush.msra.mxu0 %v209
      %216 = vmatpush.msra.mxu0 %v208
      %217 = vmatpush.msra.mxu0 %v207
      %218 = vmatpush.msra.mxu0 %v206
      %219 = vmatpush.msra.mxu0 %v205
      %220 = vmatpush.msra.mxu0 %v204
      %221 = vmatpush.msra.mxu0 %v203
      %222 = vmatpush.msra.mxu0 %v202
      %223 = vmatpush.msra.mxu0 %v201
      %224 = vmatpush.msra.mxu0 %v200
      %225 = vmatpush.msra.mxu0 %v199
      %226 = vmatpush.msra.mxu0 %v198
      %227 = vmatpush.msra.mxu0 %v197
      %228 = vmatpush.msra.mxu0 %v196
      %229 = vmatmul.f32.gmra.mxu0 0.0
      %v230 = vpop.f32.mrf.mxu0
      %v231 = vadd.f32 0.0, %v230
      %232 = vdwg.mxu0
      %v233 = vadd.f32 %v212, %v231
      %v234 = vtanh.pop %v233
      %s235 = scalar_lea.vmem [#allocation2], 8
      %v236 = vld [vmem:[%s235] sm:$0xff]
      %237 = vmatpush.msra.mxu0 %v211
      %238 = vmatpush.msra.mxu0 %v210
      %239 = vmatpush.msra.mxu0 %v209
      %240 = vmatpush.msra.mxu0 %v208
      %241 = vmatpush.msra.mxu0 %v207
      %242 = vmatpush.msra.mxu0 %v206
      %243 = vmatpush.msra.mxu0 %v205
      %244 = vmatpush.msra.mxu0 %v204
      %245 = vmatpush.msra.mxu0 %v203
      %246 = vmatpush.msra.mxu0 %v202
      %247 = vmatpush.msra.mxu0 %v201
      %248 = vmatpush.msra.mxu0 %v200
      %249 = vmatpush.msra.mxu0 %v199
      %250 = vmatpush.msra.mxu0 %v198
      %251 = vmatpush.msra.mxu0 %v197
      %252 = vmatpush.msra.mxu0 %v196
      %253 = vmatmul.f32.gmra.mxu0 %v234
      %v254 = vpop.f32.mrf.mxu0
      %v255 = vadd.f32 0.0, %v254
      %256 = vdwg.mxu0
      %v257 = vadd.f32 %v236, %v255
      %v258 = vtanh.pop %v257
      %s259 = scalar_lea.vmem [#allocation2], 16
      %v260 = vld [vmem:[%s259] sm:$0xff]
      %261 = vmatpush.msra.mxu0 %v211
      %262 = vmatpush.msra.mxu0 %v210
      %263 = vmatpush.msra.mxu0 %v209
      %264 = vmatpush.msra.mxu0 %v208
      %265 = vmatpush.msra.mxu0 %v207
      %266 = vmatpush.msra.mxu0 %v206
      %267 = vmatpush.msra.mxu0 %v205
      %268 = vmatpush.msra.mxu0 %v204
      %269 = vmatpush.msra.mxu0 %v203
      %270 = vmatpush.msra.mxu0 %v202
      %271 = vmatpush.msra.mxu0 %v201
      %272 = vmatpush.msra.mxu0 %v200
      %273 = vmatpush.msra.mxu0 %v199
      %274 = vmatpush.msra.mxu0 %v198
      %275 = vmatpush.msra.mxu0 %v197
      %276 = vmatpush.msra.mxu0 %v196
      %277 = vmatmul.f32.gmra.mxu0 %v258
      %v278 = vpop.f32.mrf.mxu0
      %v279 = vadd.f32 0.0, %v278
      %280 = vdwg.mxu0
      %v281 = vadd.f32 %v260, %v279
      %v282 = vtanh.pop %v281
      %s283 = scalar_lea.vmem [#allocation2], 24
      %v284 = vld [vmem:[%s283] sm:$0xff]
      %285 = vmatpush.msra.mxu0 %v211
      %286 = vmatpush.msra.mxu0 %v210
      %287 = vmatpush.msra.mxu0 %v209
      %288 = vmatpush.msra.mxu0 %v208
      %289 = vmatpush.msra.mxu0 %v207
      %290 = vmatpush.msra.mxu0 %v206
      %291 = vmatpush.msra.mxu0 %v205
      %292 = vmatpush.msra.mxu0 %v204
      %293 = vmatpush.msra.mxu0 %v203
      %294 = vmatpush.msra.mxu0 %v202
      %295 = vmatpush.msra.mxu0 %v201
      %296 = vmatpush.msra.mxu0 %v200
      %297 = vmatpush.msra.mxu0 %v199
      %298 = vmatpush.msra.mxu0 %v198
      %299 = vmatpush.msra.mxu0 %v197
      %300 = vmatpush.msra.mxu0 %v196
      %301 = vmatmul.f32.gmra.mxu0 %v282
      %v302 = vpop.f32.mrf.mxu0
      %v303 = vadd.f32 0.0, %v302
      %304 = vdwg.mxu0
      %v305 = vadd.f32 %v284, %v303
      %v306 = vtanh.pop %v305
      %s307 = scalar_lea.vmem [#allocation2], 32
      %v308 = vld [vmem:[%s307] sm:$0xff]
      %309 = vmatpush.msra.mxu0 %v211
      %310 = vmatpush.msra.mxu0 %v210
      %311 = vmatpush.msra.mxu0 %v209
      %312 = vmatpush.msra.mxu0 %v208
      %313 = vmatpush.msra.mxu0 %v207
      %314 = vmatpush.msra.mxu0 %v206
      %315 = vmatpush.msra.mxu0 %v205
      %316 = vmatpush.msra.mxu0 %v204
      %317 = vmatpush.msra.mxu0 %v203
      %318 = vmatpush.msra.mxu0 %v202
      %319 = vmatpush.msra.mxu0 %v201
      %320 = vmatpush.msra.mxu0 %v200
      %321 = vmatpush.msra.mxu0 %v199
      %322 = vmatpush.msra.mxu0 %v198
      %323 = vmatpush.msra.mxu0 %v197
      %324 = vmatpush.msra.mxu0 %v196
      %325 = vmatmul.f32.gmra.mxu0 %v306
      %v326 = vpop.f32.mrf.mxu0
      %v327 = vadd.f32 0.0, %v326
      %328 = vdwg.mxu0
      %v329 = vadd.f32 %v308, %v327
      %v330 = vtanh.pop %v329
      %s331 = scalar_lea.vmem [#allocation2], 40
      %v332 = vld [vmem:[%s331] sm:$0xff]
      %333 = vmatpush.msra.mxu0 %v211
      %334 = vmatpush.msra.mxu0 %v210
      %335 = vmatpush.msra.mxu0 %v209
      %336 = vmatpush.msra.mxu0 %v208
      %337 = vmatpush.msra.mxu0 %v207
      %338 = vmatpush.msra.mxu0 %v206
      %339 = vmatpush.msra.mxu0 %v205
      %340 = vmatpush.msra.mxu0 %v204
      %341 = vmatpush.msra.mxu0 %v203
      %342 = vmatpush.msra.mxu0 %v202
      %343 = vmatpush.msra.mxu0 %v201
      %344 = vmatpush.msra.mxu0 %v200
      %345 = vmatpush.msra.mxu0 %v199
      %346 = vmatpush.msra.mxu0 %v198
      %347 = vmatpush.msra.mxu0 %v197
      %348 = vmatpush.msra.mxu0 %v196
      %349 = vmatmul.f32.gmra.mxu0 %v330
      %v350 = vpop.f32.mrf.mxu0
      %v351 = vadd.f32 0.0, %v350
      %352 = vdwg.mxu0
      %v353 = vadd.f32 %v332, %v351
      %v354 = vtanh.pop %v353
      %s355 = scalar_lea.vmem [#allocation2], 48
      %v356 = vld [vmem:[%s355] sm:$0xff]
      %357 = vmatpush.msra.mxu0 %v211
      %358 = vmatpush.msra.mxu0 %v210
      %359 = vmatpush.msra.mxu0 %v209
      %360 = vmatpush.msra.mxu0 %v208
      %361 = vmatpush.msra.mxu0 %v207
      %362 = vmatpush.msra.mxu0 %v206
      %363 = vmatpush.msra.mxu0 %v205
      %364 = vmatpush.msra.mxu0 %v204
      %365 = vmatpush.msra.mxu0 %v203
      %366 = vmatpush.msra.mxu0 %v202
      %367 = vmatpush.msra.mxu0 %v201
      %368 = vmatpush.msra.mxu0 %v200
      %369 = vmatpush.msra.mxu0 %v199
      %370 = vmatpush.msra.mxu0 %v198
      %371 = vmatpush.msra.mxu0 %v197
      %372 = vmatpush.msra.mxu0 %v196
      %373 = vmatmul.f32.gmra.mxu0 %v354
      %v374 = vpop.f32.mrf.mxu0
      %v375 = vadd.f32 0.0, %v374
      %376 = vdwg.mxu0
      %v377 = vadd.f32 %v356, %v375
      %v378 = vtanh.pop %v377
      %s379 = scalar_lea.vmem [#allocation2], 56
      %v380 = vld [vmem:[%s379] sm:$0xff]
      %381 = vmatpush.msra.mxu0 %v211
      %382 = vmatpush.msra.mxu0 %v210
      %383 = vmatpush.msra.mxu0 %v209
      %384 = vmatpush.msra.mxu0 %v208
      %385 = vmatpush.msra.mxu0 %v207
      %386 = vmatpush.msra.mxu0 %v206
      %387 = vmatpush.msra.mxu0 %v205
      %388 = vmatpush.msra.mxu0 %v204
      %389 = vmatpush.msra.mxu0 %v203
      %390 = vmatpush.msra.mxu0 %v202
      %391 = vmatpush.msra.mxu0 %v201
      %392 = vmatpush.msra.mxu0 %v200
      %393 = vmatpush.msra.mxu0 %v199
      %394 = vmatpush.msra.mxu0 %v198
      %395 = vmatpush.msra.mxu0 %v197
      %396 = vmatpush.msra.mxu0 %v196
      %397 = vmatmul.f32.gmra.mxu0 %v378
      %v398 = vpop.f32.mrf.mxu0
      %v399 = vadd.f32 0.0, %v398
      %400 = vdwg.mxu0
      %v401 = vadd.f32 %v380, %v399
      %v402 = vtanh.pop %v401
      %403 = vst [vmem:[#allocation3] sm:$0xff] %v402
    $region37: #{rnn_language_model_forward.1} parent=1 // pred_fallthru
      _
    %v404 = vld [vmem:[#allocation3] sm:$0xff]
    %v405 = vpack.c.bf16 %v404, %v404
    %v406 = vld [vmem:[#allocation6] sm:$0xf]
    %v407 = vld [vmem:[#allocation6 + $0x4] sm:$0xf]
    %v408 = vld [vmem:[#allocation6 + $0x8] sm:$0xf]
    %v409 = vld [vmem:[#allocation6 + $0xc] sm:$0xf]
    %v410 = vld [vmem:[#allocation6 + $0x10] sm:$0xf]
    %v411 = vld [vmem:[#allocation6 + $0x14] sm:$0xf]
    %v412 = vld [vmem:[#allocation6 + $0x18] sm:$0xf]
    %v413 = vld [vmem:[#allocation6 + $0x1c] sm:$0xf]
    %v414 = vld [vmem:[#allocation6 + $0x20] sm:$0xf]
    %v415 = vld [vmem:[#allocation6 + $0x24] sm:$0xf]
    %v416 = vld [vmem:[#allocation6 + $0x28] sm:$0xf]
    %v417 = vld [vmem:[#allocation6 + $0x2c] sm:$0xf]
    %v418 = vld [vmem:[#allocation6 + $0x30] sm:$0xf]
    %v419 = vld [vmem:[#allocation6 + $0x34] sm:$0xf]
    %v420 = vld [vmem:[#allocation6 + $0x38] sm:$0xf]
    %v421 = vld [vmem:[#allocation6 + $0x3c] sm:$0xf]
    %v422 = vld [vmem:[%s5] sm:$0x1]
    %v424 = vperm.slane %v422, 0
    %v442 = vunpack.c.l.b16 %v406
    %v443 = vunpack.c.l.b16 %v407
    %v444 = vunpack.c.l.b16 %v408
    %v445 = vunpack.c.l.b16 %v409
    %v446 = vunpack.c.l.b16 %v410
    %v447 = vunpack.c.l.b16 %v411
    %v448 = vunpack.c.l.b16 %v412
    %v449 = vunpack.c.l.b16 %v413
    %v450 = vunpack.c.l.b16 %v414
    %v451 = vunpack.c.l.b16 %v415
    %v452 = vunpack.c.l.b16 %v416
    %v453 = vunpack.c.l.b16 %v417
    %v454 = vunpack.c.l.b16 %v418
    %v455 = vunpack.c.l.b16 %v419
    %v456 = vunpack.c.l.b16 %v420
    %v457 = vunpack.c.l.b16 %v421
    %v458 = vpack.c.b16 %v443, %v442
    %v459 = vpack.c.b16 %v445, %v444
    %v460 = vpack.c.b16 %v447, %v446
    %v461 = vpack.c.b16 %v449, %v448
    %v462 = vpack.c.b16 %v451, %v450
    %v463 = vpack.c.b16 %v453, %v452
    %v464 = vpack.c.b16 %v455, %v454
    %v465 = vpack.c.b16 %v457, %v456
    %474 = vmatpush.bf16.msra.mxu0 %v465
    %475 = vmatpush.bf16.msra.mxu0 %v464
    %476 = vmatpush.bf16.msra.mxu0 %v463
    %477 = vmatpush.bf16.msra.mxu0 %v462
    %478 = vmatpush.bf16.msra.mxu0 %v461
    %479 = vmatpush.bf16.msra.mxu0 %v460
    %480 = vmatpush.bf16.msra.mxu0 %v459
    %481 = vmatpush.bf16.msra.mxu0 %v458
    %482 = vmatmul.bf16.gmra.mxu0 %v405
    %v483 = vpop.f32.mrf.mxu0
    %v484 = vadd.f32 %v424, %v483
    %v485 = vpop.f32.mrf.mxu0
    %486 = vdwg.mxu0
    %487 = vst [vmem:[%s6] sm:$0xff] %v484
    // Predicated region
    $region38: #{rnn_language_model_forward.1} parent=1 // pred_check
      _
    $region39: #{rnn_language_model_forward.1} parent=1 // pred_check_branch
      %489 = sbr.rel (0) target = $region41
    $region40: #{rnn_language_model_forward.1} parent=1 // pred_region
      _
    $region41: #{rnn_language_model_forward.1} parent=1 // pred_fallthru
      _
    // Predicated region
    $region42: #{rnn_language_model_forward.1} parent=1 // pred_check
      _
    $region43: #{rnn_language_model_forward.1} parent=1 // pred_check_branch
      %491 = sbr.rel (0) target = $region45
    $region44: #{rnn_language_model_forward.1} parent=1 // pred_region
      _
    $region45: #{rnn_language_model_forward.1} parent=1 // pred_fallthru
      _
    %492 = vsyncpa [#allocation5], 1
    %493 = vsyncpa [#allocation7], 1

</llo_original>
